<compile_context>
chip_gen: v7x
topology: tpu7x:2x2x1
jax: 0.10.0
libtpu: 0.0.40
codegen_flags: <defaults>
</compile_context>

<pallas_src>
import math

import jax
import jax.numpy as jnp
from jax.experimental import pallas as pl
from jax.experimental.pallas import tpu as pltpu

NUM_CLASSES = 8                       # including background class 0
FEAT_DIM    = 32
IMG_H = IMG_W = 16
HW          = IMG_H * IMG_W
W_SHIFT     = IMG_W.bit_length() - 1  # log2(IMG_W); IMG_W is a power of two
ANCHOR_SIZE = 8.0
BBOX_XFORM_CLIP = math.log(1000.0 / 16.0)   # torchvision BoxCoder clamp
HEAD_OUT    = NUM_CLASSES + 4
SLAB_ROWS   = FEAT_DIM + HEAD_OUT     # 44
SLAB_COLS   = FEAT_DIM + 1            # 33


def _detect_kernel(x_ref, w_ref, out_ref):
    """x_ref: [C+1, HW] (last row = ones), w_ref: [44, 33], out_ref: [8, HW]."""
    c_aug, hw = x_ref.shape

    # Backbone 1x1 conv as matmul; bias folded in via the ones row of x.
    x  = x_ref[...].astype(jnp.bfloat16)                          # [C+1, HW]
    w1 = w_ref[0:FEAT_DIM, 0:c_aug].astype(jnp.bfloat16)          # [F, C+1]
    feat = jnp.dot(w1, x, preferred_element_type=jnp.float32)     # MXU
    feat = jnp.maximum(feat, 0.0)                                 # [F, HW] ReLU

    # Fused cls+box head; head bias folded in via an appended ones row.
    feat_aug = jnp.concatenate(
        [feat, jnp.ones((1, hw), jnp.float32)], axis=0).astype(jnp.bfloat16)
    wh = w_ref[FEAT_DIM:, :].astype(jnp.bfloat16)                 # [NC+4, F+1]
    head = jnp.dot(wh, feat_aug, preferred_element_type=jnp.float32)  # [NC+4, HW]

    logits = head[:NUM_CLASSES, :]                                # [NC, HW]

    # Softmax-based foreground score / label without the full softmax divide.
    m_all = jnp.max(logits, axis=0, keepdims=True)                # [1, HW]
    e = jnp.exp(logits - m_all)                                   # EUP
    inv_denom = pl.reciprocal(jnp.sum(e, axis=0, keepdims=True), approx=True)

    row_idx = jax.lax.broadcasted_iota(jnp.int32, logits.shape, 0)
    fg_logits = jnp.where(row_idx == 0, jnp.full_like(logits, -jnp.inf), logits)
    fg_max = jnp.max(fg_logits, axis=0, keepdims=True)            # [1, HW]
    # Clamp guards the ~2^-12 overshoot of the approx reciprocal.
    score = jnp.clip(jnp.exp(fg_max - m_all) * inv_denom, 0.0, 1.0)

    cand = jnp.where(fg_logits >= fg_max, row_idx, NUM_CLASSES)
    label = jnp.min(cand, axis=0, keepdims=True)                  # class id 1..NC-1

    # Anchors generated in-kernel: one ANCHOR_SIZE square per cell, centered.
    pos = jax.lax.broadcasted_iota(jnp.int32, (1, hw), 1)
    acx = (pos & (IMG_W - 1)).astype(jnp.float32) + 0.5
    acy = (pos >> W_SHIFT).astype(jnp.float32) + 0.5

    # Decode boxes (torchvision BoxCoder, unit weights, aw = ah = ANCHOR_SIZE).
    dx = head[NUM_CLASSES + 0:NUM_CLASSES + 1, :]
    dy = head[NUM_CLASSES + 1:NUM_CLASSES + 2, :]
    dw = jnp.minimum(head[NUM_CLASSES + 2:NUM_CLASSES + 3, :], BBOX_XFORM_CLIP)
    dh = jnp.minimum(head[NUM_CLASSES + 3:NUM_CLASSES + 4, :], BBOX_XFORM_CLIP)
    pcx = dx * ANCHOR_SIZE + acx
    pcy = dy * ANCHOR_SIZE + acy
    pw  = jnp.exp(dw) * ANCHOR_SIZE
    ph  = jnp.exp(dh) * ANCHOR_SIZE
    x1 = jnp.clip(pcx - 0.5 * pw, 0.0, float(IMG_W))
    y1 = jnp.clip(pcy - 0.5 * ph, 0.0, float(IMG_H))
    x2 = jnp.clip(pcx + 0.5 * pw, 0.0, float(IMG_W))
    y2 = jnp.clip(pcy + 0.5 * ph, 0.0, float(IMG_H))

    # Single unmasked full-tile store of the packed [8, HW] slab.
    slab = jnp.concatenate(
        [x1, y1, x2, y2, score, label.astype(jnp.float32),
         jnp.zeros((2, hw), jnp.float32)], axis=0)
    out_ref[...] = slab


def faster_rcnn_forward(x_nchw, w_slab):
    """Returns (boxes [HW,4] f32, labels [HW] i32, scores [HW] f32) for image 0."""
    n, c, h, w = x_nchw.shape
    assert h == IMG_H and w == IMG_W
    hw = h * w
    c_aug = c + 1

    # NCHW -> [N, C+1, HW]: spatial on the lane axis, channels + ones row on sublanes.
    x_flat = x_nchw.reshape(n, c, hw)
    x_aug = jnp.concatenate([x_flat, jnp.ones((n, 1, hw), x_flat.dtype)], axis=1)

    packed = pl.pallas_call(
        _detect_kernel,
        out_shape=jax.ShapeDtypeStruct((n, 8, hw), jnp.float32),
        grid=(n,),
        in_specs=[
            pl.BlockSpec((None, c_aug, hw), lambda b: (b, 0, 0)),    # image b
            pl.BlockSpec((SLAB_ROWS, SLAB_COLS), lambda b: (0, 0)),  # resident weights
        ],
        out_specs=pl.BlockSpec((None, 8, hw), lambda b: (b, 0, 0)),
        compiler_params=pltpu.CompilerParams(
            dimension_semantics=("parallel",)),
    )(x_aug, w_slab)

    # Matches the PyTorch wrapper: outputs[0] -> first image's detections.
    p0 = packed[0]
    boxes  = p0[0:4, :].T                    # [HW, 4]
    scores = p0[4, :]                        # [HW]
    labels = p0[5, :].astype(jnp.int32)      # [HW]
    return boxes, labels, scores


def make_params(key, c_in):
    """Pack backbone weight+bias and fused head weight+bias into one [44,33] slab."""
    k = jax.random.split(key, 3)
    w1 = 0.1 * jax.random.normal(k[0], (FEAT_DIM, c_in), jnp.float32)
    b1 = jnp.zeros((FEAT_DIM, 1), jnp.float32)
    w1_aug = jnp.concatenate([w1, b1], axis=1)                      # [F, C+1]
    wc = 0.1  * jax.random.normal(k[1], (NUM_CLASSES, FEAT_DIM), jnp.float32)
    wb = 0.05 * jax.random.normal(k[2], (4, FEAT_DIM), jnp.float32)
    wh = jnp.concatenate([wc, wb], axis=0)                          # [NC+4, F]
    bh = jnp.zeros((HEAD_OUT, 1), jnp.float32)
    wh_aug = jnp.concatenate([wh, bh], axis=1)                      # [NC+4, F+1]
    w1_pad = jnp.pad(w1_aug, ((0, 0), (0, SLAB_COLS - (c_in + 1))))
    w_slab = jnp.concatenate([w1_pad, wh_aug], axis=0)              # [44, 33]
    return w_slab


if __name__ == "__main__":
    key = jax.random.PRNGKey(0)
    k_param, k_x = jax.random.split(key)
    w_slab = make_params(k_param, 3)
    x = jax.random.normal(k_x, (2, 3, IMG_H, IMG_W), jnp.float32)   # NCHW like PyTorch

    boxes, labels, scores = jax.jit(faster_rcnn_forward)(x, w_slab)
    jax.block_until_ready((boxes, labels, scores))

    assert boxes.shape == (HW, 4) and boxes.dtype == jnp.float32
    assert labels.shape == (HW,) and labels.dtype == jnp.int32
    assert scores.shape == (HW,) and scores.dtype == jnp.float32
    assert bool(jnp.all(labels >= 1)) and bool(jnp.all(labels < NUM_CLASSES))
    assert bool(jnp.all(scores >= 0.0)) and bool(jnp.all(scores <= 1.0))
    assert bool(jnp.all(boxes[:, 2] >= boxes[:, 0])) and bool(jnp.all(boxes[:, 3] >= boxes[:, 1]))
    print("KERNEL_OK")
</pallas_src>

<mosaic_0001>
module attributes {stable_mosaic.version = 11 : i64} {
  func.func @_detect_kernel(%arg0: i32, %arg1: memref<1x4x256xf32, #tpu.memory_space<vmem>>, %arg2: memref<44x33xf32, #tpu.memory_space<vmem>>, %arg3: memref<1x8x256xf32, #tpu.memory_space<vmem>>) attributes {dimension_semantics = [#tpu.dimension_semantics<parallel>], iteration_bounds = array<i64: 2>, scalar_prefetch = 0 : i64, scratch_operands = 0 : i64, tpu.core_type = #tpu.core_type<tc>, window_params = [{transform_indices = @transform_0, window_bounds = array<i64: 1, 4, 256>}, {pipeline_mode = #tpu.pipeline_mode<synchronous>, transform_indices = @transform_1, window_bounds = array<i64: 44, 33>}, {transform_indices = @transform_2, window_bounds = array<i64: 1, 8, 256>}]} {
    %c0 = arith.constant 0 : index
    %c0_0 = arith.constant 0 : index
    %c0_1 = arith.constant 0 : index
    %0 = vector.load %arg1[%c0, %c0_0, %c0_1] : memref<1x4x256xf32, #tpu.memory_space<vmem>>, vector<1x4x256xf32>
    %1 = vector.shape_cast %0 : vector<1x4x256xf32> to vector<4x256xf32>
    %2 = arith.truncf %1 : vector<4x256xf32> to vector<4x256xbf16>
    %c0_2 = arith.constant 0 : index
    %c0_3 = arith.constant 0 : index
    %3 = vector.load %arg2[%c0_2, %c0_3] : memref<44x33xf32, #tpu.memory_space<vmem>>, vector<32x4xf32>
    %4 = arith.truncf %3 : vector<32x4xf32> to vector<32x4xbf16>
    %cst = arith.constant dense<0.000000e+00> : vector<32x256xf32>
    %5 = tpu.matmul %4, %2, %cst {dimension_numbers = #tpu.dot_dimension_numbers<[1], [0], [0], [1], [0, 0, 1, 1], [], []>} : vector<32x4xbf16>, vector<4x256xbf16>, vector<32x256xf32> -> vector<32x256xf32>
    %cst_4 = arith.constant 0.000000e+00 : f32
    %6 = vector.broadcast %cst_4 : f32 to vector<32x256xf32>
    %7 = arith.maximumf %5, %6 : vector<32x256xf32>
    %cst_5 = arith.constant 1.000000e+00 : f32
    %8 = vector.broadcast %cst_5 : f32 to vector<1x256xf32>
    %9 = tpu.concatenate %7, %8 in 0 : vector<32x256xf32>, vector<1x256xf32> -> vector<33x256xf32>
    %10 = arith.truncf %9 : vector<33x256xf32> to vector<33x256xbf16>
    %c32 = arith.constant 32 : index
    %c0_6 = arith.constant 0 : index
    %11 = vector.load %arg2[%c32, %c0_6] : memref<44x33xf32, #tpu.memory_space<vmem>>, vector<12x33xf32>
    %12 = arith.truncf %11 : vector<12x33xf32> to vector<12x33xbf16>
    %cst_7 = arith.constant dense<0.000000e+00> : vector<12x256xf32>
    %13 = tpu.matmul %12, %10, %cst_7 {dimension_numbers = #tpu.dot_dimension_numbers<[1], [0], [0], [1], [0, 0, 1, 1], [], []>} : vector<12x33xbf16>, vector<33x256xbf16>, vector<12x256xf32> -> vector<12x256xf32>
    %14 = vector.extract_strided_slice %13 {offsets = [0, 0], sizes = [8, 256], strides = [1, 1]} : vector<12x256xf32> to vector<8x256xf32>
    %cst_8 = arith.constant dense<0xFF800000> : vector<256xf32>
    %15 = vector.multi_reduction <maximumf>, %14, %cst_8 [0] : vector<8x256xf32> to vector<256xf32>
    %16 = vector.shape_cast %15 : vector<256xf32> to vector<1x256xf32>
    %17 = vector.broadcast %16 : vector<1x256xf32> to vector<8x256xf32>
    %18 = arith.subf %14, %17 : vector<8x256xf32>
    %19 = math.exp %18 : vector<8x256xf32>
    %cst_9 = arith.constant dense<0.000000e+00> : vector<256xf32>
    %20 = vector.multi_reduction <add>, %19, %cst_9 [0] : vector<8x256xf32> to vector<256xf32>
    %21 = vector.shape_cast %20 : vector<256xf32> to vector<1x256xf32>
    %22 = tpu.reciprocal %21 {approx = true} : vector<1x256xf32> -> vector<1x256xf32>
    %23 = tpu.iota {dimensions = array<i32: 0>} : vector<8x256xi32>
    %c0_i32 = arith.constant 0 : i32
    %24 = vector.broadcast %c0_i32 : i32 to vector<8x256xi32>
    %25 = arith.cmpi eq, %23, %24 : vector<8x256xi32>
    %cst_10 = arith.constant 0xFF800000 : f32
    %26 = vector.broadcast %cst_10 : f32 to vector<8x256xf32>
    %27 = arith.select %25, %26, %14 : vector<8x256xi1>, vector<8x256xf32>
    %cst_11 = arith.constant dense<0xFF800000> : vector<256xf32>
    %28 = vector.multi_reduction <maximumf>, %27, %cst_11 [0] : vector<8x256xf32> to vector<256xf32>
    %29 = vector.shape_cast %28 : vector<256xf32> to vector<1x256xf32>
    %30 = arith.subf %29, %16 : vector<1x256xf32>
    %31 = math.exp %30 : vector<1x256xf32>
    %32 = arith.mulf %31, %22 : vector<1x256xf32>
    %cst_12 = arith.constant 0.000000e+00 : f32
    %cst_13 = arith.constant 1.000000e+00 : f32
    %33 = vector.broadcast %cst_12 : f32 to vector<1x256xf32>
    %34 = arith.maximumf %33, %32 : vector<1x256xf32>
    %35 = vector.broadcast %cst_13 : f32 to vector<1x256xf32>
    %36 = arith.minimumf %35, %34 : vector<1x256xf32>
    %37 = vector.broadcast %29 : vector<1x256xf32> to vector<8x256xf32>
    %38 = arith.cmpf oge, %27, %37 : vector<8x256xf32>
    %c8_i32 = arith.constant 8 : i32
    %39 = vector.broadcast %c8_i32 : i32 to vector<8x256xi32>
    %40 = arith.select %38, %23, %39 : vector<8x256xi1>, vector<8x256xi32>
    %cst_14 = arith.constant dense<2147483647> : vector<256xi32>
    %41 = vector.multi_reduction <minsi>, %40, %cst_14 [0] : vector<8x256xi32> to vector<256xi32>
    %42 = vector.shape_cast %41 : vector<256xi32> to vector<1x256xi32>
    %43 = tpu.iota {dimensions = array<i32: 1>} : vector<1x256xi32>
    %c15_i32 = arith.constant 15 : i32
    %44 = vector.broadcast %c15_i32 : i32 to vector<1x256xi32>
    %45 = arith.andi %43, %44 : vector<1x256xi32>
    %46 = arith.sitofp %45 : vector<1x256xi32> to vector<1x256xf32>
    %cst_15 = arith.constant 5.000000e-01 : f32
    %47 = vector.broadcast %cst_15 : f32 to vector<1x256xf32>
    %48 = arith.addf %46, %47 : vector<1x256xf32>
    %c4_i32 = arith.constant 4 : i32
    %49 = vector.broadcast %c4_i32 : i32 to vector<1x256xi32>
    %50 = arith.shrsi %43, %49 : vector<1x256xi32>
    %51 = arith.sitofp %50 : vector<1x256xi32> to vector<1x256xf32>
    %cst_16 = arith.constant 5.000000e-01 : f32
    %52 = vector.broadcast %cst_16 : f32 to vector<1x256xf32>
    %53 = arith.addf %51, %52 : vector<1x256xf32>
    %54 = vector.extract_strided_slice %13 {offsets = [8, 0], sizes = [1, 256], strides = [1, 1]} : vector<12x256xf32> to vector<1x256xf32>
    %55 = vector.extract_strided_slice %13 {offsets = [9, 0], sizes = [1, 256], strides = [1, 1]} : vector<12x256xf32> to vector<1x256xf32>
    %56 = vector.extract_strided_slice %13 {offsets = [10, 0], sizes = [1, 256], strides = [1, 1]} : vector<12x256xf32> to vector<1x256xf32>
    %cst_17 = arith.constant 4.13516665 : f32
    %57 = vector.broadcast %cst_17 : f32 to vector<1x256xf32>
    %58 = arith.minimumf %56, %57 : vector<1x256xf32>
    %59 = vector.extract_strided_slice %13 {offsets = [11, 0], sizes = [1, 256], strides = [1, 1]} : vector<12x256xf32> to vector<1x256xf32>
    %cst_18 = arith.constant 4.13516665 : f32
    %60 = vector.broadcast %cst_18 : f32 to vector<1x256xf32>
    %61 = arith.minimumf %59, %60 : vector<1x256xf32>
    %cst_19 = arith.constant 8.000000e+00 : f32
    %62 = vector.broadcast %cst_19 : f32 to vector<1x256xf32>
    %63 = arith.mulf %54, %62 : vector<1x256xf32>
    %64 = arith.addf %63, %48 : vector<1x256xf32>
    %cst_20 = arith.constant 8.000000e+00 : f32
    %65 = vector.broadcast %cst_20 : f32 to vector<1x256xf32>
    %66 = arith.mulf %55, %65 : vector<1x256xf32>
    %67 = arith.addf %66, %53 : vector<1x256xf32>
    %68 = math.exp %58 : vector<1x256xf32>
    %cst_21 = arith.constant 8.000000e+00 : f32
    %69 = vector.broadcast %cst_21 : f32 to vector<1x256xf32>
    %70 = arith.mulf %68, %69 : vector<1x256xf32>
    %71 = math.exp %61 : vector<1x256xf32>
    %cst_22 = arith.constant 8.000000e+00 : f32
    %72 = vector.broadcast %cst_22 : f32 to vector<1x256xf32>
    %73 = arith.mulf %71, %72 : vector<1x256xf32>
    %cst_23 = arith.constant 5.000000e-01 : f32
    %74 = vector.broadcast %cst_23 : f32 to vector<1x256xf32>
    %75 = arith.mulf %74, %70 : vector<1x256xf32>
    %76 = arith.subf %64, %75 : vector<1x256xf32>
    %cst_24 = arith.constant 0.000000e+00 : f32
    %cst_25 = arith.constant 1.600000e+01 : f32
    %77 = vector.broadcast %cst_24 : f32 to vector<1x256xf32>
    %78 = arith.maximumf %77, %76 : vector<1x256xf32>
    %79 = vector.broadcast %cst_25 : f32 to vector<1x256xf32>
    %80 = arith.minimumf %79, %78 : vector<1x256xf32>
    %cst_26 = arith.constant 5.000000e-01 : f32
    %81 = vector.broadcast %cst_26 : f32 to vector<1x256xf32>
    %82 = arith.mulf %81, %73 : vector<1x256xf32>
    %83 = arith.subf %67, %82 : vector<1x256xf32>
    %cst_27 = arith.constant 0.000000e+00 : f32
    %cst_28 = arith.constant 1.600000e+01 : f32
    %84 = vector.broadcast %cst_27 : f32 to vector<1x256xf32>
    %85 = arith.maximumf %84, %83 : vector<1x256xf32>
    %86 = vector.broadcast %cst_28 : f32 to vector<1x256xf32>
    %87 = arith.minimumf %86, %85 : vector<1x256xf32>
    %cst_29 = arith.constant 5.000000e-01 : f32
    %88 = vector.broadcast %cst_29 : f32 to vector<1x256xf32>
    %89 = arith.mulf %88, %70 : vector<1x256xf32>
    %90 = arith.addf %64, %89 : vector<1x256xf32>
    %cst_30 = arith.constant 0.000000e+00 : f32
    %cst_31 = arith.constant 1.600000e+01 : f32
    %91 = vector.broadcast %cst_30 : f32 to vector<1x256xf32>
    %92 = arith.maximumf %91, %90 : vector<1x256xf32>
    %93 = vector.broadcast %cst_31 : f32 to vector<1x256xf32>
    %94 = arith.minimumf %93, %92 : vector<1x256xf32>
    %cst_32 = arith.constant 5.000000e-01 : f32
    %95 = vector.broadcast %cst_32 : f32 to vector<1x256xf32>
    %96 = arith.mulf %95, %73 : vector<1x256xf32>
    %97 = arith.addf %67, %96 : vector<1x256xf32>
    %cst_33 = arith.constant 0.000000e+00 : f32
    %cst_34 = arith.constant 1.600000e+01 : f32
    %98 = vector.broadcast %cst_33 : f32 to vector<1x256xf32>
    %99 = arith.maximumf %98, %97 : vector<1x256xf32>
    %100 = vector.broadcast %cst_34 : f32 to vector<1x256xf32>
    %101 = arith.minimumf %100, %99 : vector<1x256xf32>
    %102 = arith.sitofp %42 : vector<1x256xi32> to vector<1x256xf32>
    %cst_35 = arith.constant 0.000000e+00 : f32
    %103 = vector.broadcast %cst_35 : f32 to vector<2x256xf32>
    %104 = tpu.concatenate %80, %87, %94, %101, %36, %102, %103 in 0 : vector<1x256xf32>, vector<1x256xf32>, vector<1x256xf32>, vector<1x256xf32>, vector<1x256xf32>, vector<1x256xf32>, vector<2x256xf32> -> vector<8x256xf32>
    %c0_36 = arith.constant 0 : index
    %c0_37 = arith.constant 0 : index
    %c0_38 = arith.constant 0 : index
    %105 = vector.load %arg3[%c0_36, %c0_37, %c0_38] : memref<1x8x256xf32, #tpu.memory_space<vmem>>, vector<1x8x256xf32>
    %106 = vector.shape_cast %105 : vector<1x8x256xf32> to vector<8x256xf32>
    %107 = vector.shape_cast %104 : vector<8x256xf32> to vector<1x8x256xf32>
    tpu.vector_store %arg3[%c0_36, %c0_37, %c0_38], %107 {strides = array<i32>} : memref<1x8x256xf32, #tpu.memory_space<vmem>>, vector<1x8x256xf32>,
    return
  }
  func.func @transform_0(%arg0: i32) -> (i32, i32, i32) {
    %c0_i32 = arith.constant 0 : i32
    %c0_i32_0 = arith.constant 0 : i32
    %c0_i32_1 = arith.constant 0 : i32
    return %arg0, %c0_i32, %c0_i32_0 : i32, i32, i32
  }
  func.func @transform_1(%arg0: i32) -> (i32, i32) {
    %c0_i32 = arith.constant 0 : i32
    %c0_i32_0 = arith.constant 0 : i32
    %c0_i32_1 = arith.constant 0 : i32
    return %c0_i32, %c0_i32_0 : i32, i32
  }
  func.func @transform_2(%arg0: i32) -> (i32, i32, i32) {
    %c0_i32 = arith.constant 0 : i32
    %c0_i32_0 = arith.constant 0 : i32
    %c0_i32_1 = arith.constant 0 : i32
    return %arg0, %c0_i32, %c0_i32_0 : i32, i32, i32
  }
}

</mosaic_0001>

<llo_original>
// kernel: faster_rcnn_forward.1
$region0: #{faster_rcnn_forward.1}
  #allocation0 [shape = 'u32[]', space=smem, size = 0x4, offset = 0x4, fixed_abs, tag = 'smem constant byte address 0x4 - core index']
  #allocation1 [shape = 'u32[144,128]{1,0:T(1,128)}', space=vmem, size = 0x12000, scoped, tag = 'internal scratch']
  %s0 = inlined_call_operand.vmem [shape: f32[2,4,256], index: 0, kind: input, shape index: {}]
  %s1 = inlined_call_operand.vmem [shape: f32[44,33], index: 1, kind: input, shape index: {}]
  %s2 = inlined_call_operand.vmem [shape: f32[2,8,256], index: 2, kind: output, shape index: {}]
  %s3 = sld [smem:[#allocation0]]
  $region41: #{faster_rcnn_forward.1} parent=0
    _
  %s5 = ssub.s32 1, %s3
  %s6 = scalar_select 0, %s5, %s3
  loop: start=0, step=1, limit=4
  $region2: #{faster_rcnn_forward.1} parent=0 // loop_pre_header
    _
  $region3: #{faster_rcnn_forward.1} parent=0 // loop_header
    %s8 = sphi 0, %s12
    %p9 = scmp.ge.s32.totalorder %s8, 4
    %s18 = sphi 0, %s20
    %s21 = sphi 0, %s18
    %s22 = sphi 0, %s21
    %s38 = sphi 0, %s22
    %s42 = sphi 0, %s42
    %s44 = sphi 0, %s42
    %s45 = sphi 0, %s44
    %s59 = sphi 0, %s45
    %s65 = sphi 0, %s67
    %s68 = sphi 0, %s65
    %s69 = sphi 0, %s68
    %s85 = sphi 0, %s69
  $region4: #{faster_rcnn_forward.1} parent=0 // loop_header_branch
    %11 = sbr.rel (%p9) target = $region8
  $region5: #{faster_rcnn_forward.1} parent=0 // loop_body
    %s13 = ssub.s32 %s8, 1
    %s14 = ssub.s32 %s8, 2
    %s15 = sadd.s32 %s8, 1
    %s16 = ssub.s32 %s8, %s15
    %p17 = scmp.eq.s32.totalorder %s16, 0
    %s19 = sadd.s32 %s18, 1
    %s20 = scalar_select %p17, %s18, %s19
    %p23 = pneg %p17
    %p24 = scmp.eq.s32.totalorder %s8, 1
    %p25 = por %p23, %p24
    %p26 = scmp.ne.s32.totalorder %s18, %s21
    %p27 = scmp.eq.s32.totalorder %s8, 0
    %p28 = por %p26, %p27
    %p29 = scmp.ne.s32.totalorder %s18, %s21
    %p30 = scmp.eq.s32.totalorder %s13, 1
    %p31 = por %p29, %p30
    %p32 = scmp.ne.s32.totalorder %s21, %s22
    %p33 = scmp.eq.s32.totalorder %s13, 0
    %p34 = por %p32, %p33
    %p35 = scmp.ne.s32.totalorder %s21, %s22
    %p36 = scmp.eq.s32.totalorder %s14, 1
    %p37 = por %p35, %p36
    %p39 = scmp.ne.s32.totalorder %s22, %s38
    %p40 = scmp.eq.s32.totalorder %s14, 0
    %p41 = por %p39, %p40
    %s43 = sadd.s32 %s42, 1
    %p46 = scmp.eq.s32.totalorder %s8, 1
    %p47 = scmp.ne.s32.totalorder %s42, %s44
    %p48 = scmp.eq.s32.totalorder %s8, 0
    %p49 = por %p47, %p48
    %p50 = scmp.ne.s32.totalorder %s42, %s44
    %p51 = scmp.eq.s32.totalorder %s13, 1
    %p52 = por %p50, %p51
    %p53 = scmp.ne.s32.totalorder %s44, %s45
    %p54 = scmp.eq.s32.totalorder %s13, 0
    %p55 = por %p53, %p54
    %p56 = scmp.ne.s32.totalorder %s44, %s45
    %p57 = scmp.eq.s32.totalorder %s14, 1
    %p58 = por %p56, %p57
    %p60 = scmp.ne.s32.totalorder %s45, %s59
    %p61 = scmp.eq.s32.totalorder %s14, 0
    %p62 = por %p60, %p61
    %s63 = ssub.s32 %s8, %s15
    %p64 = scmp.eq.s32.totalorder %s63, 0
    %s66 = sadd.s32 %s65, 1
    %s67 = scalar_select %p64, %s65, %s66
    %p70 = pneg %p64
    %p71 = scmp.eq.s32.totalorder %s8, 1
    %p72 = por %p70, %p71
    %p73 = scmp.ne.s32.totalorder %s65, %s68
    %p74 = scmp.eq.s32.totalorder %s8, 0
    %p75 = por %p73, %p74
    %p76 = scmp.ne.s32.totalorder %s65, %s68
    %p77 = scmp.eq.s32.totalorder %s13, 1
    %p78 = por %p76, %p77
    %p79 = scmp.ne.s32.totalorder %s68, %s69
    %p80 = scmp.eq.s32.totalorder %s13, 0
    %p81 = por %p79, %p80
    %p82 = scmp.ne.s32.totalorder %s68, %s69
    %p83 = scmp.eq.s32.totalorder %s14, 1
    %p84 = por %p82, %p83
    %p86 = scmp.ne.s32.totalorder %s69, %s85
    %p87 = scmp.eq.s32.totalorder %s14, 0
    %p88 = por %p86, %p87
    %p89 = scmp.le.s32.totalorder 1, %s8
    %p90 = scmp.lt.s32.totalorder %s8, 3
    %p91 = pnand %p89, %p90
    %p92 = pneg %p91
    // Predicated region
    $region9: #{faster_rcnn_forward.1} parent=5 // pred_check
      _
    $region10: #{faster_rcnn_forward.1} parent=5 // pred_check_branch
      %94 = sbr.rel (%p91) target = $region12
    $region11: #{faster_rcnn_forward.1} parent=5 // pred_region
      %s95 = ssub.s32 %s8, 1
      // Predicated region
      $region13: #{faster_rcnn_forward.1} parent=11 // pred_check
        %p96 = pneg %p55
      $region14: #{faster_rcnn_forward.1} parent=11 // pred_check_branch
        %98 = sbr.rel (%p96) target = $region16
      $region15: #{faster_rcnn_forward.1} parent=11 // pred_region
        _
      $region16: #{faster_rcnn_forward.1} parent=11 // pred_fallthru
        _
    $region12: #{faster_rcnn_forward.1} parent=5 // pred_fallthru
      _
    %p99 = scmp.lt.s32.totalorder %s8, 2
    // Predicated region
    $region17: #{faster_rcnn_forward.1} parent=5 // pred_check
      %p100 = pneg %p99
    $region18: #{faster_rcnn_forward.1} parent=5 // pred_check_branch
      %102 = sbr.rel (%p100) target = $region20
    $region19: #{faster_rcnn_forward.1} parent=5 // pred_region
      // Predicated region
      $region21: #{faster_rcnn_forward.1} parent=19 // pred_check
        %p103 = pneg %p28
      $region22: #{faster_rcnn_forward.1} parent=19 // pred_check_branch
        %105 = sbr.rel (%p103) target = $region24
      $region23: #{faster_rcnn_forward.1} parent=19 // pred_region
        %p106 = scmp.lt.s32.totalorder %s8, 1
        %s107 = scalar_select %p106, %s8, 1
        %s108 = smul.addr %s107, 2
        %s109 = smul.addr %s108, 4
        %s110 = scalar_lea.vmem %s0, %s109
      $region24: #{faster_rcnn_forward.1} parent=19 // pred_fallthru
        _
    $region20: #{faster_rcnn_forward.1} parent=5 // pred_fallthru
      _
    %p111 = scmp.le.s32.totalorder 1, %s8
    %p112 = scmp.lt.s32.totalorder %s8, 3
    %p113 = pnand %p111, %p112
    %p114 = pneg %p113
    // Predicated region
    $region25: #{faster_rcnn_forward.1} parent=5 // pred_check
      _
    $region26: #{faster_rcnn_forward.1} parent=5 // pred_check_branch
      %116 = sbr.rel (%p113) target = $region28
    $region27: #{faster_rcnn_forward.1} parent=5 // pred_region
      %s117 = ssub.s32 %s8, 1
      %p118 = scmp.lt.s32.totalorder %s13, 1
      %s119 = scalar_select %p118, %s13, 1
      %s120 = smul.addr %s119, 2
      %s121 = smul.addr %s120, 4
      %s122 = scalar_lea.vmem %s0, %s121
      %p123 = pneg %p34
      %p124 = pneg %p31
      %p125 = pneg %p55
      %p126 = pneg %p52
      %p127 = pneg %p81
      %p128 = pneg %p78
      %p129 = scmp.lt.s32.totalorder %s13, 1
      %s130 = scalar_select %p129, %s13, 1
      %s131 = smul.addr %s130, 2
      %s132 = smul.addr %s131, 8
      %s133 = scalar_lea.vmem %s2, %s132
      %p134 = scmp.lt.s32.totalorder %s13, 1
      %s135 = scalar_select %p134, %s13, 1
      %s136 = smul.addr %s135, 2
      %s137 = smul.addr %s136, 4
      %s138 = scalar_lea.vmem %s0, %s137
      %p139 = scmp.lt.s32.totalorder %s13, 1
      %s140 = scalar_select %p139, %s13, 1
      %s141 = smul.addr %s140, 2
      %s142 = smul.addr %s141, 8
      %s143 = scalar_lea.vmem %s2, %s142
      %v145 = vld [vmem:[%s138] sm:$0xff]
      %v147 = vcombine.high %v145, %v145
      %v149 = vpack.c.bf16 %v145, %v145
      %v150 = vpack.c.bf16 %v147, %v147
      %v151 = vld [vmem:[%s1] sm:$0xff]
      %v152 = vld [vmem:[%s1 + $0x8] sm:$0xff]
      %v153 = vld [vmem:[%s1 + $0x10] sm:$0xff]
      %v154 = vld [vmem:[%s1 + $0x18] sm:$0xff]
      %v155 = vpack.c.bf16 %v152, %v151
      %v156 = vpack.c.bf16 %v154, %v153
      %vm157 = vcmask 31744
      %v159 = vsel %vm157, %v155, 0
      %v162 = vsel %vm157, %v156, 0
      %vm164 = vcmask 1041408
      %v166 = vsel %vm164, %v149, 0
      %v169 = vsel %vm164, %v150, 0
      %171 = vmatprep.subr.bf16.mxu0 %v169
      %172 = vmatpush1.bf16.msra.mxu0 %v166
      %173 = vmatprep.subr.bf16.mxu0 0
      %174 = vmatpush1.bf16.msra.mxu0 0
      %175 = vmatprep.subr.bf16.mxu0 0
      %176 = vmatpush1.bf16.msra.mxu0 0
      %177 = vmatprep.subr.bf16.mxu0 0
      %178 = vmatpush1.bf16.msra.mxu0 0
      %179 = vmatprep.subr.bf16.mxu0 0
      %180 = vmatpush1.bf16.msra.mxu0 0
      %181 = vmatprep.subr.bf16.mxu0 0
      %182 = vmatpush1.bf16.msra.mxu0 0
      %183 = vmatprep.subr.bf16.mxu0 0
      %184 = vmatpush1.bf16.msra.mxu0 0
      %185 = vmatprep.subr.bf16.mxu0 0
      %186 = vmatpush1.bf16.msra.mxu0 0
      %187 = vmatprep.subr.bf16.mxu0 0
      %188 = vmatpush1.bf16.msra.mxu0 0
      %189 = vmatprep.subr.bf16.mxu0 0
      %190 = vmatpush1.bf16.msra.mxu0 0
      %191 = vmatprep.subr.bf16.mxu0 0
      %192 = vmatpush1.bf16.msra.mxu0 0
      %193 = vmatprep.subr.bf16.mxu0 0
      %194 = vmatpush1.bf16.msra.mxu0 0
      %195 = vmatprep.subr.bf16.mxu0 0
      %196 = vmatpush1.bf16.msra.mxu0 0
      %197 = vmatprep.subr.bf16.mxu0 0
      %198 = vmatpush1.bf16.msra.mxu0 0
      %199 = vmatprep.subr.bf16.mxu0 0
      %200 = vmatpush1.bf16.msra.mxu0 0
      %201 = vmatprep.subr.bf16.mxu0 0
      %202 = vmatpush1.bf16.msra.mxu0 0
      %203 = vmatprep.mubr.bf16.mxu0 0
      %204 = vmatmul.mubr.bf16.gmra.mrb[0].mxu0 %v159
      %v205 = vpop.f32.mrb[0].mxu0
      %v206 = vadd.f32 0.0, %v205
      %v207 = vpop.f32.mrb[0].mxu0
      %v208 = vadd.f32 0.0, %v207
      %v209 = vpop.f32.mrb[0].mxu0
      %v210 = vadd.f32 0.0, %v209
      %v211 = vpop.f32.mrb[0].mxu0
      %v212 = vadd.f32 0.0, %v211
      %213 = vmatprep.mubr.bf16.mxu0 0
      %214 = vmatmul.mubr.bf16.gmra.mrb[0].mxu0 %v162
      %v215 = vpop.f32.mrb[0].mxu0
      %v216 = vadd.f32 0.0, %v215
      %v217 = vpop.f32.mrb[0].mxu0
      %v218 = vadd.f32 0.0, %v217
      %v219 = vpop.f32.mrb[0].mxu0
      %v220 = vadd.f32 0.0, %v219
      %v221 = vpop.f32.mrb[0].mxu0
      %v222 = vadd.f32 0.0, %v221
      %223 = vdwg.mxu0
      %v224 = vmax.f32 %v206, 0.0
      %v225 = vmax.f32 %v208, 0.0
      %v226 = vmax.f32 %v210, 0.0
      %v227 = vmax.f32 %v212, 0.0
      %v228 = vmax.f32 %v216, 0.0
      %v229 = vmax.f32 %v218, 0.0
      %v230 = vmax.f32 %v220, 0.0
      %v231 = vmax.f32 %v222, 0.0
      %v232 = vpack.c.bf16 %v226, %v224
      %v233 = vpack.c.bf16 %v227, %v225
      %v234 = vpack.c.bf16 %v230, %v228
      %v235 = vpack.c.bf16 %v231, %v229
      %v236 = vpack.c.bf16 1.0, 1.0
      %v237 = vld [vmem:[%s1 + $0x20] sm:$0xff]
      %v238 = vld [vmem:[%s1 + $0x28] sm:$0xf]
      %v239 = vpack.c.bf16 %v238, %v237
      %vm240 = vcmask 269312
      %v242 = vsel %vm240, %v239, 0
      %vm244 = vcmask 1040384
      %v245 = vsel 0, 4294967295, 65535
      %v246 = vsel %vm244, %v245, 0
      %v248 = vand.u32 %v236, %v246
      %250 = vmatprep.subr.bf16.mxu0 %v233
      %251 = vmatpush1.bf16.msra.mxu0 %v232
      %252 = vmatprep.subr.bf16.mxu0 %v235
      %253 = vmatpush1.bf16.msra.mxu0 %v234
      %254 = vmatprep.subr.bf16.mxu0 %v248
      %255 = vmatpush1.bf16.msra.mxu0 %v248
      %256 = vmatprep.subr.bf16.mxu0 0
      %257 = vmatpush1.bf16.msra.mxu0 0
      %258 = vmatprep.subr.bf16.mxu0 0
      %259 = vmatpush1.bf16.msra.mxu0 0
      %260 = vmatprep.subr.bf16.mxu0 0
      %261 = vmatpush1.bf16.msra.mxu0 0
      %262 = vmatprep.subr.bf16.mxu0 0
      %263 = vmatpush1.bf16.msra.mxu0 0
      %264 = vmatprep.subr.bf16.mxu0 0
      %265 = vmatpush1.bf16.msra.mxu0 0
      %266 = vmatprep.subr.bf16.mxu0 0
      %267 = vmatpush1.bf16.msra.mxu0 0
      %268 = vmatprep.subr.bf16.mxu0 0
      %269 = vmatpush1.bf16.msra.mxu0 0
      %270 = vmatprep.subr.bf16.mxu0 0
      %271 = vmatpush1.bf16.msra.mxu0 0
      %272 = vmatprep.subr.bf16.mxu0 0
      %273 = vmatpush1.bf16.msra.mxu0 0
      %274 = vmatprep.subr.bf16.mxu0 0
      %275 = vmatpush1.bf16.msra.mxu0 0
      %276 = vmatprep.subr.bf16.mxu0 0
      %277 = vmatpush1.bf16.msra.mxu0 0
      %278 = vmatprep.subr.bf16.mxu0 0
      %279 = vmatpush1.bf16.msra.mxu0 0
      %280 = vmatprep.subr.bf16.mxu0 0
      %281 = vmatpush1.bf16.msra.mxu0 0
      %282 = vmatprep.mubr.bf16.mxu0 0
      %283 = vmatmul.mubr.bf16.gmra.mrb[0].mxu0 %v242
      %v284 = vpop.f32.mrb[0].mxu0
      %v285 = vadd.f32 0.0, %v284
      %v286 = vpop.f32.mrb[0].mxu0
      %v287 = vadd.f32 0.0, %v286
      %v288 = vpop.f32.mrb[0].mxu0
      %v289 = vadd.f32 0.0, %v288
      %v290 = vpop.f32.mrb[0].mxu0
      %v291 = vadd.f32 0.0, %v290
      %292 = vdwg.mxu0
      %v293 = vrot.slane %v285, 4
      %v294 = vmax.f32 %v285, %v293
      %v295 = vrot.slane %v294, 2
      %v296 = vmax.f32 %v294, %v295
      %v297 = vrot.slane %v296, 1
      %v298 = vmax.f32 %v296, %v297
      %v299 = vrot.slane %v287, 4
      %v300 = vmax.f32 %v287, %v299
      %v301 = vrot.slane %v300, 2
      %v302 = vmax.f32 %v300, %v301
      %v303 = vrot.slane %v302, 1
      %v304 = vmax.f32 %v302, %v303
      %v305 = vsub.f32 %v285, %v298
      %v306 = vsub.f32 %v287, %v304
      %v307 = vmul.f32 %v305, 1.442695
      %v308 = vpow.pop %v307
      %v309 = vmul.f32 %v306, 1.442695
      %v310 = vpow.pop %v309
      %v311 = vrot.slane %v308, 4
      %v312 = vadd.f32 %v308, %v311
      %v313 = vrot.slane %v312, 2
      %v314 = vadd.f32 %v312, %v313
      %v315 = vrot.slane %v314, 1
      %v316 = vadd.f32 %v314, %v315
      %v317 = vrot.slane %v310, 4
      %v318 = vadd.f32 %v310, %v317
      %v319 = vrot.slane %v318, 2
      %v320 = vadd.f32 %v318, %v319
      %v321 = vrot.slane %v320, 1
      %v322 = vadd.f32 %v320, %v321
      %v323 = vrcp.pop %v316
      %v324 = vrcp.pop %v322
      %v325 = vlaneseq
      %v326 = vshrl.u32 %v325, 7
      %vm327 = vcmp.eq.s32.totalorder %v326, 0
      %v328 = vsel %vm327, -inf, %v285
      %v329 = vsel %vm327, -inf, %v287
      %v330 = vrot.slane %v328, 4
      %v331 = vmax.f32 %v328, %v330
      %v332 = vrot.slane %v331, 2
      %v333 = vmax.f32 %v331, %v332
      %v334 = vrot.slane %v333, 1
      %v335 = vmax.f32 %v333, %v334
      %v336 = vrot.slane %v329, 4
      %v337 = vmax.f32 %v329, %v336
      %v338 = vrot.slane %v337, 2
      %v339 = vmax.f32 %v337, %v338
      %v340 = vrot.slane %v339, 1
      %v341 = vmax.f32 %v339, %v340
      %v342 = vsub.f32 %v335, %v298
      %v343 = vsub.f32 %v341, %v304
      %v344 = vmul.f32 %v342, 1.442695
      %v345 = vpow.pop %v344
      %v346 = vmul.f32 %v343, 1.442695
      %v347 = vpow.pop %v346
      %v348 = vmul.f32 %v345, %v323
      %v349 = vmul.f32 %v347, %v324
      %v350 = vmax.f32 %v348, 0.0
      %v351 = vmax.f32 %v349, 0.0
      %v352 = vmin.f32 %v350, 1.0
      %v353 = vmin.f32 %v351, 1.0
      %vm354 = vcmp.ge.f32.partialorder %v328, %v335
      %vm355 = vcmp.ge.f32.partialorder %v329, %v341
      %v356 = vsel %vm354, %v326, 8
      %v357 = vsel %vm355, %v326, 8
      %v358 = vrot.slane %v356, 4
      %vm359 = vcmp.lt.s32.totalorder %v356, %v358
      %v360 = vsel %vm359, %v356, %v358
      %v361 = vrot.slane %v360, 2
      %vm362 = vcmp.lt.s32.totalorder %v360, %v361
      %v363 = vsel %vm362, %v360, %v361
      %v364 = vrot.slane %v363, 1
      %vm365 = vcmp.lt.s32.totalorder %v363, %v364
      %v366 = vsel %vm365, %v363, %v364
      %v367 = vrot.slane %v357, 4
      %vm368 = vcmp.lt.s32.totalorder %v357, %v367
      %v369 = vsel %vm368, %v357, %v367
      %v370 = vrot.slane %v369, 2
      %vm371 = vcmp.lt.s32.totalorder %v369, %v370
      %v372 = vsel %vm371, %v369, %v370
      %v373 = vrot.slane %v372, 1
      %vm374 = vcmp.lt.s32.totalorder %v372, %v373
      %v375 = vsel %vm374, %v372, %v373
      %v376 = vlaneseq
      %v377 = vand.u32 %v376, 127
      %v378 = vadd.s32 %v377, 128
      %v379 = vand.u32 %v377, 15
      %v380 = vand.u32 %v378, 15
      %v381 = vcvt.s32.f32 %v379
      %v382 = vcvt.s32.f32 %v380
      %v383 = vadd.f32 %v381, 0.5
      %v384 = vadd.f32 %v382, 0.5
      %v385 = vshra.s32 %v377, 4
      %v386 = vshra.s32 %v378, 4
      %v387 = vcvt.s32.f32 %v385
      %v388 = vcvt.s32.f32 %v386
      %v389 = vadd.f32 %v387, 0.5
      %v390 = vadd.f32 %v388, 0.5
      %v391 = vmin.f32 %v289, 4.1351666
      %v392 = vmin.f32 %v291, 4.1351666
      %v393 = vmul.f32 %v289, 8.0
      %v394 = vmul.f32 %v291, 8.0
      %v395 = vadd.f32 %v393, %v383
      %v396 = vadd.f32 %v394, %v384
      %v397 = vadd.f32 %v393, %v389
      %v398 = vadd.f32 %v394, %v390
      %v399 = vmul.f32 %v391, 1.442695
      %v400 = vpow.pop %v399
      %v401 = vmul.f32 %v392, 1.442695
      %v402 = vpow.pop %v401
      %v403 = vmul.f32 %v400, 8.0
      %v404 = vmul.f32 %v402, 8.0
      %v405 = vmul.f32 %v403, 0.5
      %v406 = vmul.f32 %v404, 0.5
      %v409 = vrot.slane %v405, 2
      %v410 = vrot.slane %v406, 2
      %v413 = vsub.f32 %v395, %v409
      %v414 = vsub.f32 %v396, %v410
      %v415 = vmax.f32 %v413, 0.0
      %v416 = vmax.f32 %v414, 0.0
      %v417 = vmin.f32 %v415, 16.0
      %v418 = vmin.f32 %v416, 16.0
      %v419 = vsub.f32 %v397, %v409
      %v420 = vsub.f32 %v398, %v410
      %v421 = vmax.f32 %v419, 0.0
      %v422 = vmax.f32 %v420, 0.0
      %v423 = vmin.f32 %v421, 16.0
      %v424 = vmin.f32 %v422, 16.0
      %v425 = vadd.f32 %v395, %v409
      %v426 = vadd.f32 %v396, %v410
      %v427 = vmax.f32 %v425, 0.0
      %v428 = vmax.f32 %v426, 0.0
      %v429 = vmin.f32 %v427, 16.0
      %v430 = vmin.f32 %v428, 16.0
      %v431 = vadd.f32 %v397, %v409
      %v432 = vadd.f32 %v398, %v410
      %v433 = vmax.f32 %v431, 0.0
      %v434 = vmax.f32 %v432, 0.0
      %v435 = vmin.f32 %v433, 16.0
      %v436 = vmin.f32 %v434, 16.0
      %v437 = vcvt.s32.f32 %v366
      %v438 = vcvt.s32.f32 %v375
      %v441 = vrot.slane %v429, 6
      %v442 = vrot.slane %v430, 6
      %v447 = vrot.slane %v435, 6
      %v448 = vrot.slane %v436, 6
      %v451 = vsel %vm244, %v417, %v423
      %v452 = vsel %vm244, %v418, %v424
      %v453 = vsel %vm164, %v451, %v441
      %v454 = vsel %vm164, %v452, %v442
      %vm455 = vcmask 1042432
      %v456 = vsel %vm455, %v453, %v447
      %v457 = vsel %vm455, %v454, %v448
      %vm458 = vcmask 1043456
      %v459 = vsel %vm458, %v456, %v352
      %v460 = vsel %vm458, %v457, %v353
      %vm461 = vcmask 1044480
      %v462 = vsel %vm461, %v459, %v437
      %v463 = vsel %vm461, %v460, %v438
      %vm464 = vcmask 1045504
      %v465 = vsel %vm464, %v462, 0.0
      %v466 = vsel %vm464, %v463, 0.0
      %467 = vst [vmem:[%s143] sm:$0xff] %v465
      %468 = vst [vmem:[%s143 + $0x8] sm:$0xff] %v466
      %p469 = scmp.lt.s32.totalorder %s13, 1
      %s470 = scalar_select %p469, %s13, 1
      %s471 = smul.addr %s470, 2
      %s472 = smul.addr %s471, 8
      %s473 = scalar_lea.vmem %s2, %s472
      // Predicated region
      $region29: #{faster_rcnn_forward.1} parent=27 // pred_check
        %p474 = pneg %p78
      $region30: #{faster_rcnn_forward.1} parent=27 // pred_check_branch
        %476 = sbr.rel (%p474) target = $region32
      $region31: #{faster_rcnn_forward.1} parent=27 // pred_region
        _
      $region32: #{faster_rcnn_forward.1} parent=27 // pred_fallthru
        _
    $region28: #{faster_rcnn_forward.1} parent=5 // pred_fallthru
      _
    %p477 = scmp.le.s32.totalorder 2, %s8
    // Predicated region
    $region33: #{faster_rcnn_forward.1} parent=5 // pred_check
      %p478 = pneg %p477
    $region34: #{faster_rcnn_forward.1} parent=5 // pred_check_branch
      %480 = sbr.rel (%p478) target = $region36
    $region35: #{faster_rcnn_forward.1} parent=5 // pred_region
      %s481 = ssub.s32 %s8, 2
      // Predicated region
      $region37: #{faster_rcnn_forward.1} parent=35 // pred_check
        %p482 = pneg %p84
      $region38: #{faster_rcnn_forward.1} parent=35 // pred_check_branch
        %484 = sbr.rel (%p482) target = $region40
      $region39: #{faster_rcnn_forward.1} parent=35 // pred_region
        %p485 = scmp.lt.s32.totalorder %s14, 1
        %s486 = scalar_select %p485, %s14, 1
        %s487 = smul.addr %s486, 2
        %s488 = smul.addr %s487, 8
        %s489 = scalar_lea.vmem %s2, %s488
      $region40: #{faster_rcnn_forward.1} parent=35 // pred_fallthru
        _
    $region36: #{faster_rcnn_forward.1} parent=5 // pred_fallthru
      _
  $region6: #{faster_rcnn_forward.1} parent=0 // loop_footer
    %s12 = sadd.s32 1, %s8
  $region7: #{faster_rcnn_forward.1} parent=0 // loop_footer_branch
    %7 = sbr.rel target = $region3
  $region8: #{faster_rcnn_forward.1} parent=0 // loop_exit
    _

</llo_original>
